<compile_context>
chip_gen: v5e
topology: v5e:2x2
jax: 0.10.0
libtpu: 0.0.40
codegen_flags: <defaults>
</compile_context>

<pallas_src>
import jax
import jax.numpy as jnp
import numpy as np
from jax import lax
from jax.experimental import pallas as pl
from jax.experimental.pallas import tpu as pltpu

# ---- model hyper-parameters (small, consistent with the module) ----
D_MODEL = 32
D_FF = 64
N_EXPERTS = 8
TOPK = 2          # n_experts_per_token
TEMP = 1.0        # temperature (no scheduler in eval -> t = 1.0)
NEG_INF = -1e30

# ---- fused-weight layout constants ----
GATE_PAD = 128                      # gate logits live in cols [0, N_EXPERTS), padded to one lane tile
HID_W = (N_EXPERTS + 1) * D_FF      # 8 routed experts + shared expert hidden = 576
BIAS_PAD = 64                       # bias-indicator section (N_EXPERTS+1 used), pads combine width to 128-multiple
CW = HID_W + BIAS_PAD               # 640  -> K of the 2nd matmul
W1W = GATE_PAD + CW                 # 768  -> N of the 1st matmul


def moe_kernel(x_ref, w1c_ref, b1c_ref, w2c_ref, eid_ref, s0_ref, out_ref):
    x = x_ref[...]                                                      # (tm, D) f32 or bf16

    # ---------- fused matmul #1: [gate | experts | shared | bias-indicators] ----------
    pre = jnp.dot(x, w1c_ref[...], preferred_element_type=jnp.float32) + b1c_ref[...]

    # ---------- routing: top-k over gate logits (first-index tie break) + softmax ----------
    logits = pre[:, :N_EXPERTS]                                         # (tm, E) f32
    iota = lax.broadcasted_iota(jnp.int32, logits.shape, 1)
    work = logits
    sel_f, val_list = [], []
    for _ in range(TOPK):
        v = jnp.max(work, axis=-1, keepdims=True)                       # (tm, 1)
        idx = jnp.min(jnp.where(work == v, iota, N_EXPERTS), axis=-1, keepdims=True)
        sel_f.append(idx.astype(jnp.float32))
        val_list.append(v)
        work = jnp.where(iota == idx, NEG_INF, work)
    wts = jnp.concatenate(val_list, axis=-1) * (1.0 / TEMP)             # (tm, k)
    m = jnp.max(wts, axis=-1, keepdims=True)
    p = jnp.exp(wts - m)
    wts = p / jnp.sum(p, axis=-1, keepdims=True)                        # softmax over the k picks

    # ---------- dense per-column routing scale over the combine section ----------
    # eid_ref / s0_ref are precomputed token-invariant (1, CW) rows (hoisted out of the
    # kernel per the perf review): eid = expert id of each column (8 = shared, -1 = pad),
    # s0 = 1/k on shared columns, 0 elsewhere.  Only TOPK compare/select passes remain.
    h = jnp.maximum(pre[:, GATE_PAD:], 0.0)                             # (tm, CW) ReLU hidden (indicators stay 1)
    scale = s0_ref[...]                                                 # (1, CW) -> broadcasts
    for j in range(TOPK):
        scale = scale + jnp.where(eid_ref[...] == sel_f[j], wts[:, j:j + 1], 0.0)

    # ---------- fused matmul #2: weighted combine (experts + shared + all output biases) ----------
    hs = (h * scale).astype(w2c_ref.dtype)
    out = jnp.dot(hs, w2c_ref[...], preferred_element_type=jnp.float32)
    out_ref[...] = out.astype(out_ref.dtype)


def pack_moe_params(params, matmul_dtype=jnp.float32):
    """Concatenate gate / routed-expert / shared-expert weights into the fused operands,
    plus the token-invariant eid / base-scale rows used by the kernel."""
    gw, gb, w1, b1, w2, b2, sw1, sb1, sw2, sb2 = params
    E, D, F = w1.shape

    w1cat = jnp.zeros((D, W1W), jnp.float32)
    w1cat = w1cat.at[:, :E].set(gw)                                                   # gate
    w1cat = w1cat.at[:, GATE_PAD:GATE_PAD + E * F].set(w1.transpose(1, 0, 2).reshape(D, E * F))
    w1cat = w1cat.at[:, GATE_PAD + E * F:GATE_PAD + HID_W].set(sw1)                   # shared W1
    # bias-indicator + pad columns keep zero weights

    b1cat = jnp.zeros((1, W1W), jnp.float32)
    b1cat = b1cat.at[:, :E].set(gb)
    b1cat = b1cat.at[:, GATE_PAD:GATE_PAD + E * F].set(b1.reshape(1, E * F))
    b1cat = b1cat.at[:, GATE_PAD + E * F:GATE_PAD + HID_W].set(sb1)
    b1cat = b1cat.at[:, GATE_PAD + HID_W:GATE_PAD + HID_W + E + 1].set(1.0)           # indicators -> relu(1)=1

    w2cat = jnp.zeros((CW, D), jnp.float32)
    w2cat = w2cat.at[:E * F, :].set(w2.reshape(E * F, D))
    w2cat = w2cat.at[E * F:HID_W, :].set(sw2)                                         # shared W2
    w2cat = w2cat.at[HID_W:HID_W + E, :].set(b2)                                      # per-expert output bias
    w2cat = w2cat.at[HID_W + E:HID_W + E + 1, :].set(sb2)                             # shared output bias

    # --- hoisted token-invariant routing-scale constants (pure layout, built on host) ---
    eid = np.full((1, CW), -1.0, np.float32)                                          # -1 = never matches
    cols = np.arange(CW)
    eid[0, :E * F] = (cols[:E * F] // F).astype(np.float32)                           # routed hidden blocks
    eid[0, E * F:HID_W] = float(E)                                                    # shared hidden block
    eid[0, HID_W:HID_W + E] = np.arange(E, dtype=np.float32)                          # routed bias indicators
    eid[0, HID_W + E] = float(E)                                                      # shared bias indicator
    scale0 = np.where(eid == float(E), 1.0 / TOPK, 0.0).astype(np.float32)            # shared expert gets 1/k

    return (w1cat.astype(matmul_dtype), b1cat, w2cat.astype(matmul_dtype),
            jnp.asarray(eid), jnp.asarray(scale0))


def shared_moe_forward(x, params, tm=1024, use_bf16=False):
    """x: (seq, batch, d_model) float32 -> (seq, batch, d_model) float32.

    use_bf16=True casts x / W1cat / W2cat to bfloat16 for the two MXU matmuls (recommended
    on v6e/v7x); routing, softmax, scale and bias math stay in f32.  Note it loosens the
    numerics vs. the f32 reference and can flip near-tie top-k picks.
    """
    T, B, D = x.shape
    N = T * B
    matmul_dtype = jnp.bfloat16 if use_bf16 else jnp.float32

    # ---- tile-size selection (review fix) ----
    # Never shrink tm below the (8-aligned) token count on single-TC parts; cap tm so the
    # f32 intermediates (~11 KB/token) stay well inside the 32 MiB VMEM limit (v7x: 64 MiB
    # physical).  Only enforce >= 2 grid steps on 2-TensorCore parts (v7x) with enough work.
    n8 = pl.cdiv(N, 8) * 8
    tm = max(8, min(tm, 2048, n8))
    try:
        kind = jax.devices()[0].device_kind.lower()
    except Exception:  # pragma: no cover - defensive; fall back to single-core behaviour
        kind = ""
    two_core = "v7" in kind
    if two_core and n8 >= 128:
        half = ((pl.cdiv(n8, 2)) + 7) // 8 * 8
        tm = min(tm, max(8, half))
    n_pad = pl.cdiv(N, tm) * tm

    xf = x.reshape(N, D).astype(matmul_dtype)
    if n_pad != N:
        xf = jnp.pad(xf, ((0, n_pad - N), (0, 0)))

    # NOTE: in a real model, pack once and cache; it is pure weight re-layout.
    w1cat, b1cat, w2cat, eid_row, scale0_row = pack_moe_params(params, matmul_dtype)

    def const_spec(shape):
        nd = len(shape)
        return pl.BlockSpec(shape, lambda i, _nd=nd: (0,) * _nd)

    out = pl.pallas_call(
        moe_kernel,
        out_shape=jax.ShapeDtypeStruct((n_pad, D), jnp.float32),
        grid=(n_pad // tm,),
        in_specs=[
            pl.BlockSpec((tm, D), lambda i: (i, 0)),   # token tile
            const_spec(w1cat.shape),                   # fused W1 (D, 768)
            const_spec(b1cat.shape),                   # fused b1 (1, 768) f32
            const_spec(w2cat.shape),                   # fused W2 (640, D)
            const_spec(eid_row.shape),                 # hoisted column->expert-id row (1, 640)
            const_spec(scale0_row.shape),              # hoisted shared-expert base scale (1, 640)
        ],
        out_specs=pl.BlockSpec((tm, D), lambda i: (i, 0)),
        compiler_params=pltpu.CompilerParams(
            dimension_semantics=("parallel",),
            vmem_limit_bytes=32 * 1024 * 1024),
    )(xf, w1cat, b1cat, w2cat, eid_row, scale0_row)
    return out[:N].reshape(T, B, D)


def reference(x, params):
    """Pure-JAX replica of the PyTorch forward (eval, balancing=False), unfused."""
    gw, gb, w1, b1, w2, b2, sw1, sb1, sw2, sb2 = params
    logits = x @ gw + gb[0]
    wts, sel = lax.top_k(logits, TOPK)
    wts = jax.nn.softmax(wts / TEMP, axis=-1)

    def expert(xe, W1, B1, W2, B2):
        return jnp.maximum(xe @ W1 + B1, 0.0) @ W2 + B2

    out = jnp.zeros(x.shape, jnp.float32)
    for e in range(N_EXPERTS):
        ye = expert(x, w1[e], b1[e], w2[e], b2[e])
        w_e = jnp.sum(jnp.where(sel == e, wts, 0.0), axis=-1, keepdims=True)
        out = out + w_e * ye
    out = out + (1.0 / TOPK) * expert(x, sw1, sb1[0], sw2, sb2[0])
    return out


if __name__ == "__main__":
    key = jax.random.PRNGKey(0)
    ks = jax.random.split(key, 12)

    T, B = 8, 2                                  # seq=8, batch=2
    x = jax.random.normal(ks[0], (T, B, D_MODEL), jnp.float32)

    params = (
        0.1 * jax.random.normal(ks[1], (D_MODEL, N_EXPERTS), jnp.float32),        # gate W
        0.1 * jax.random.normal(ks[2], (1, N_EXPERTS), jnp.float32),              # gate b
        0.1 * jax.random.normal(ks[3], (N_EXPERTS, D_MODEL, D_FF), jnp.float32),  # expert W1
        0.1 * jax.random.normal(ks[4], (N_EXPERTS, D_FF), jnp.float32),           # expert b1
        0.1 * jax.random.normal(ks[5], (N_EXPERTS, D_FF, D_MODEL), jnp.float32),  # expert W2
        0.1 * jax.random.normal(ks[6], (N_EXPERTS, D_MODEL), jnp.float32),        # expert b2
        0.1 * jax.random.normal(ks[7], (D_MODEL, D_FF), jnp.float32),             # shared W1
        0.1 * jax.random.normal(ks[8], (1, D_FF), jnp.float32),                   # shared b1
        0.1 * jax.random.normal(ks[9], (D_FF, D_MODEL), jnp.float32),             # shared W2
        0.1 * jax.random.normal(ks[10], (1, D_MODEL), jnp.float32),               # shared b2
    )

    # f32 path: exact vs. the pure-JAX reference.
    out = jax.block_until_ready(shared_moe_forward(x, params))
    ref = jax.block_until_ready(reference(x, params))
    np.testing.assert_allclose(np.asarray(out), np.asarray(ref),
                               rtol=1e-5, atol=2e-5)

    # bf16-matmul fast path (v6e/v7x): compile + run only; no tight check since near-tie
    # top-k picks may flip under bf16 gate logits.
    _ = jax.block_until_ready(shared_moe_forward(x, params, use_bf16=True))

    print("KERNEL_OK")
</pallas_src>

<mosaic_0001>
module attributes {stable_mosaic.version = 11 : i64} {
  func.func @moe_kernel(%arg0: i32, %arg1: memref<16x32xf32, #tpu.memory_space<vmem>>, %arg2: memref<32x768xf32, #tpu.memory_space<vmem>>, %arg3: memref<1x768xf32, #tpu.memory_space<vmem>>, %arg4: memref<640x32xf32, #tpu.memory_space<vmem>>, %arg5: memref<1x640xf32, #tpu.memory_space<vmem>>, %arg6: memref<1x640xf32, #tpu.memory_space<vmem>>, %arg7: memref<16x32xf32, #tpu.memory_space<vmem>>) attributes {dimension_semantics = [#tpu.dimension_semantics<parallel>], iteration_bounds = array<i64: 1>, scalar_prefetch = 0 : i64, scratch_operands = 0 : i64, tpu.core_type = #tpu.core_type<tc>, window_params = [{transform_indices = @transform_0, window_bounds = array<i64: 16, 32>}, {pipeline_mode = #tpu.pipeline_mode<synchronous>, transform_indices = @transform_1, window_bounds = array<i64: 32, 768>}, {pipeline_mode = #tpu.pipeline_mode<synchronous>, transform_indices = @transform_2, window_bounds = array<i64: 1, 768>}, {pipeline_mode = #tpu.pipeline_mode<synchronous>, transform_indices = @transform_3, window_bounds = array<i64: 640, 32>}, {pipeline_mode = #tpu.pipeline_mode<synchronous>, transform_indices = @transform_4, window_bounds = array<i64: 1, 640>}, {pipeline_mode = #tpu.pipeline_mode<synchronous>, transform_indices = @transform_5, window_bounds = array<i64: 1, 640>}, {transform_indices = @transform_6, window_bounds = array<i64: 16, 32>}]} {
    %c0 = arith.constant 0 : index
    %c0_0 = arith.constant 0 : index
    %0 = vector.load %arg1[%c0, %c0_0] : memref<16x32xf32, #tpu.memory_space<vmem>>, vector<16x32xf32>
    %c0_1 = arith.constant 0 : index
    %c0_2 = arith.constant 0 : index
    %1 = vector.load %arg2[%c0_1, %c0_2] : memref<32x768xf32, #tpu.memory_space<vmem>>, vector<32x768xf32>
    %cst = arith.constant dense<0.000000e+00> : vector<16x768xf32>
    %2 = tpu.matmul %0, %1, %cst {dimension_numbers = #tpu.dot_dimension_numbers<[1], [0], [0], [1], [0, 0, 1, 1], [], []>} : vector<16x32xf32>, vector<32x768xf32>, vector<16x768xf32> -> vector<16x768xf32>
    %c0_3 = arith.constant 0 : index
    %c0_4 = arith.constant 0 : index
    %3 = vector.load %arg3[%c0_3, %c0_4] : memref<1x768xf32, #tpu.memory_space<vmem>>, vector<1x768xf32>
    %4 = vector.broadcast %3 : vector<1x768xf32> to vector<16x768xf32>
    %5 = arith.addf %2, %4 : vector<16x768xf32>
    %6 = vector.extract_strided_slice %5 {offsets = [0, 0], sizes = [16, 8], strides = [1, 1]} : vector<16x768xf32> to vector<16x8xf32>
    %7 = tpu.iota {dimensions = array<i32: 1>} : vector<16x8xi32>
    %cst_5 = arith.constant dense<0xFF800000> : vector<16xf32>
    %8 = vector.multi_reduction <maximumf>, %6, %cst_5 [1] : vector<16x8xf32> to vector<16xf32>
    %9 = vector.shape_cast %8 : vector<16xf32> to vector<16x1xf32>
    %10 = vector.broadcast %9 : vector<16x1xf32> to vector<16x8xf32>
    %11 = arith.cmpf oeq, %6, %10 : vector<16x8xf32>
    %c8_i32 = arith.constant 8 : i32
    %12 = vector.broadcast %c8_i32 : i32 to vector<16x8xi32>
    %13 = arith.select %11, %7, %12 : vector<16x8xi1>, vector<16x8xi32>
    %cst_6 = arith.constant dense<2147483647> : vector<16xi32>
    %14 = vector.multi_reduction <minsi>, %13, %cst_6 [1] : vector<16x8xi32> to vector<16xi32>
    %15 = vector.shape_cast %14 : vector<16xi32> to vector<16x1xi32>
    %16 = arith.sitofp %15 : vector<16x1xi32> to vector<16x1xf32>
    %17 = vector.broadcast %15 : vector<16x1xi32> to vector<16x8xi32>
    %18 = arith.cmpi eq, %7, %17 : vector<16x8xi32>
    %cst_7 = arith.constant -1.000000e+30 : f32
    %19 = vector.broadcast %cst_7 : f32 to vector<16x8xf32>
    %20 = arith.select %18, %19, %6 : vector<16x8xi1>, vector<16x8xf32>
    %cst_8 = arith.constant dense<0xFF800000> : vector<16xf32>
    %21 = vector.multi_reduction <maximumf>, %20, %cst_8 [1] : vector<16x8xf32> to vector<16xf32>
    %22 = vector.shape_cast %21 : vector<16xf32> to vector<16x1xf32>
    %23 = vector.broadcast %22 : vector<16x1xf32> to vector<16x8xf32>
    %24 = arith.cmpf oeq, %20, %23 : vector<16x8xf32>
    %c8_i32_9 = arith.constant 8 : i32
    %25 = vector.broadcast %c8_i32_9 : i32 to vector<16x8xi32>
    %26 = arith.select %24, %7, %25 : vector<16x8xi1>, vector<16x8xi32>
    %cst_10 = arith.constant dense<2147483647> : vector<16xi32>
    %27 = vector.multi_reduction <minsi>, %26, %cst_10 [1] : vector<16x8xi32> to vector<16xi32>
    %28 = vector.shape_cast %27 : vector<16xi32> to vector<16x1xi32>
    %29 = arith.sitofp %28 : vector<16x1xi32> to vector<16x1xf32>
    %30 = tpu.concatenate %9, %22 in 1 : vector<16x1xf32>, vector<16x1xf32> -> vector<16x2xf32>
    %cst_11 = arith.constant 1.000000e+00 : f32
    %31 = vector.broadcast %cst_11 : f32 to vector<16x2xf32>
    %32 = arith.mulf %30, %31 : vector<16x2xf32>
    %cst_12 = arith.constant dense<0xFF800000> : vector<16xf32>
    %33 = vector.multi_reduction <maximumf>, %32, %cst_12 [1] : vector<16x2xf32> to vector<16xf32>
    %34 = vector.shape_cast %33 : vector<16xf32> to vector<16x1xf32>
    %35 = vector.broadcast %34 : vector<16x1xf32> to vector<16x2xf32>
    %36 = arith.subf %32, %35 : vector<16x2xf32>
    %37 = math.exp %36 : vector<16x2xf32>
    %cst_13 = arith.constant dense<0.000000e+00> : vector<16xf32>
    %38 = vector.multi_reduction <add>, %37, %cst_13 [1] : vector<16x2xf32> to vector<16xf32>
    %39 = vector.shape_cast %38 : vector<16xf32> to vector<16x1xf32>
    %40 = vector.broadcast %39 : vector<16x1xf32> to vector<16x2xf32>
    %41 = arith.divf %37, %40 : vector<16x2xf32>
    %42 = vector.extract_strided_slice %5 {offsets = [0, 128], sizes = [16, 640], strides = [1, 1]} : vector<16x768xf32> to vector<16x640xf32>
    %cst_14 = arith.constant 0.000000e+00 : f32
    %43 = vector.broadcast %cst_14 : f32 to vector<16x640xf32>
    %44 = arith.maximumf %42, %43 : vector<16x640xf32>
    %c0_15 = arith.constant 0 : index
    %c0_16 = arith.constant 0 : index
    %45 = vector.load %arg6[%c0_15, %c0_16] : memref<1x640xf32, #tpu.memory_space<vmem>>, vector<1x640xf32>
    %c0_17 = arith.constant 0 : index
    %c0_18 = arith.constant 0 : index
    %46 = vector.load %arg5[%c0_17, %c0_18] : memref<1x640xf32, #tpu.memory_space<vmem>>, vector<1x640xf32>
    %47 = vector.broadcast %46 : vector<1x640xf32> to vector<16x640xf32>
    %48 = vector.broadcast %16 : vector<16x1xf32> to vector<16x640xf32>
    %49 = arith.cmpf oeq, %47, %48 : vector<16x640xf32>
    %50 = vector.extract_strided_slice %41 {offsets = [0, 0], sizes = [16, 1], strides = [1, 1]} : vector<16x2xf32> to vector<16x1xf32>
    %cst_19 = arith.constant 0.000000e+00 : f32
    %51 = vector.shape_cast %50 : vector<16x1xf32> to vector<16x1xf32>
    %52 = vector.broadcast %51 : vector<16x1xf32> to vector<16x640xf32>
    %53 = vector.broadcast %cst_19 : f32 to vector<16x640xf32>
    %54 = arith.select %49, %52, %53 : vector<16x640xi1>, vector<16x640xf32>
    %55 = vector.broadcast %45 : vector<1x640xf32> to vector<16x640xf32>
    %56 = arith.addf %55, %54 : vector<16x640xf32>
    %c0_20 = arith.constant 0 : index
    %c0_21 = arith.constant 0 : index
    %57 = vector.load %arg5[%c0_20, %c0_21] : memref<1x640xf32, #tpu.memory_space<vmem>>, vector<1x640xf32>
    %58 = vector.broadcast %57 : vector<1x640xf32> to vector<16x640xf32>
    %59 = vector.broadcast %29 : vector<16x1xf32> to vector<16x640xf32>
    %60 = arith.cmpf oeq, %58, %59 : vector<16x640xf32>
    %61 = vector.extract_strided_slice %41 {offsets = [0, 1], sizes = [16, 1], strides = [1, 1]} : vector<16x2xf32> to vector<16x1xf32>
    %cst_22 = arith.constant 0.000000e+00 : f32
    %62 = vector.shape_cast %61 : vector<16x1xf32> to vector<16x1xf32>
    %63 = vector.broadcast %62 : vector<16x1xf32> to vector<16x640xf32>
    %64 = vector.broadcast %cst_22 : f32 to vector<16x640xf32>
    %65 = arith.select %60, %63, %64 : vector<16x640xi1>, vector<16x640xf32>
    %66 = arith.addf %56, %65 : vector<16x640xf32>
    %67 = arith.mulf %44, %66 : vector<16x640xf32>
    %c0_23 = arith.constant 0 : index
    %c0_24 = arith.constant 0 : index
    %68 = vector.load %arg4[%c0_23, %c0_24] : memref<640x32xf32, #tpu.memory_space<vmem>>, vector<640x32xf32>
    %cst_25 = arith.constant dense<0.000000e+00> : vector<16x32xf32>
    %69 = tpu.matmul %67, %68, %cst_25 {dimension_numbers = #tpu.dot_dimension_numbers<[1], [0], [0], [1], [0, 0, 1, 1], [], []>} : vector<16x640xf32>, vector<640x32xf32>, vector<16x32xf32> -> vector<16x32xf32>
    %c0_26 = arith.constant 0 : index
    %c0_27 = arith.constant 0 : index
    %70 = vector.load %arg7[%c0_26, %c0_27] : memref<16x32xf32, #tpu.memory_space<vmem>>, vector<16x32xf32>
    tpu.vector_store %arg7[%c0_26, %c0_27], %69 {strides = array<i32>} : memref<16x32xf32, #tpu.memory_space<vmem>>, vector<16x32xf32>,
    return
  }
  func.func @transform_0(%arg0: i32) -> (i32, i32) {
    %c0_i32 = arith.constant 0 : i32
    %c0_i32_0 = arith.constant 0 : i32
    return %arg0, %c0_i32 : i32, i32
  }
  func.func @transform_1(%arg0: i32) -> (i32, i32) {
    %c0_i32 = arith.constant 0 : i32
    %c0_i32_0 = arith.constant 0 : i32
    %c0_i32_1 = arith.constant 0 : i32
    return %c0_i32, %c0_i32_0 : i32, i32
  }
  func.func @transform_2(%arg0: i32) -> (i32, i32) {
    %c0_i32 = arith.constant 0 : i32
    %c0_i32_0 = arith.constant 0 : i32
    %c0_i32_1 = arith.constant 0 : i32
    return %c0_i32, %c0_i32_0 : i32, i32
  }
  func.func @transform_3(%arg0: i32) -> (i32, i32) {
    %c0_i32 = arith.constant 0 : i32
    %c0_i32_0 = arith.constant 0 : i32
    %c0_i32_1 = arith.constant 0 : i32
    return %c0_i32, %c0_i32_0 : i32, i32
  }
  func.func @transform_4(%arg0: i32) -> (i32, i32) {
    %c0_i32 = arith.constant 0 : i32
    %c0_i32_0 = arith.constant 0 : i32
    %c0_i32_1 = arith.constant 0 : i32
    return %c0_i32, %c0_i32_0 : i32, i32
  }
  func.func @transform_5(%arg0: i32) -> (i32, i32) {
    %c0_i32 = arith.constant 0 : i32
    %c0_i32_0 = arith.constant 0 : i32
    %c0_i32_1 = arith.constant 0 : i32
    return %c0_i32, %c0_i32_0 : i32, i32
  }
  func.func @transform_6(%arg0: i32) -> (i32, i32) {
    %c0_i32 = arith.constant 0 : i32
    %c0_i32_0 = arith.constant 0 : i32
    return %arg0, %c0_i32 : i32, i32
  }
}

</mosaic_0001>

<llo_original>
// kernel: tpu_custom_call.1
$region0: #{tpu_custom_call.1}
  #allocation0 [shape = 'u32[]', space=smem, size = 0x4, offset = 0x4, fixed_abs, tag = 'smem constant byte address 0x4 - core index']
  #allocation1 [shape = 'u32[72,128]{1,0:T(1,128)}', space=vmem, size = 0x9000, scoped, tag = 'internal scratch']
  %s0 = inlined_call_operand.vmem [shape: f32[16,32], index: 0, kind: input, shape index: {}]
  %s1 = inlined_call_operand.vmem [shape: f32[32,768], index: 1, kind: input, shape index: {}]
  %s2 = inlined_call_operand.vmem [shape: f32[1,768], index: 2, kind: input, shape index: {}]
  %s3 = inlined_call_operand.vmem [shape: f32[640,32], index: 3, kind: input, shape index: {}]
  %s4 = inlined_call_operand.vmem [shape: f32[1,640], index: 4, kind: input, shape index: {}]
  %s5 = inlined_call_operand.vmem [shape: f32[1,640], index: 5, kind: input, shape index: {}]
  %s6 = inlined_call_operand.hbm [shape: f32[16,32], index: 6, kind: output, shape index: {}]
  %s7 = sld [smem:[#allocation0]]
  $region34: #{tpu_custom_call.1} parent=0
    _
  %s9 = ssub.s32 1, %s7
  %s10 = scalar_select 0, %s9, %s7
  $region1: #{tpu_custom_call.1} parent=0
    #allocation2 [shape = 'u8[8192]{0}', space=vmem, size = 0x2000, scoped, tag = 'output window, operand 0, single buffered']
    #allocation3 [shape = 's32[1]{0}', space=sflag, size = 0x4, scoped, tag = 'scoped memory for tpu_custom_call.1']
    %11 = vsyncpa [#allocation3], 0
    // Predicated region
    $region2: #{tpu_custom_call.1} parent=1 // pred_check
      _
    $region3: #{tpu_custom_call.1} parent=1 // pred_check_branch
      %13 = sbr.rel (0) target = $region5
    $region4: #{tpu_custom_call.1} parent=1 // pred_region
      _
    $region5: #{tpu_custom_call.1} parent=1 // pred_fallthru
      _
    // Predicated region
    $region6: #{tpu_custom_call.1} parent=1 // pred_check
      _
    $region7: #{tpu_custom_call.1} parent=1 // pred_check_branch
      %15 = sbr.rel (0) target = $region9
    $region8: #{tpu_custom_call.1} parent=1 // pred_region
      _
    $region9: #{tpu_custom_call.1} parent=1 // pred_fallthru
      _
    // Predicated region
    $region10: #{tpu_custom_call.1} parent=1 // pred_check
      _
    $region11: #{tpu_custom_call.1} parent=1 // pred_check_branch
      %17 = sbr.rel (0) target = $region13
    $region12: #{tpu_custom_call.1} parent=1 // pred_region
      _
    $region13: #{tpu_custom_call.1} parent=1 // pred_fallthru
      _
    // Predicated region
    $region14: #{tpu_custom_call.1} parent=1 // pred_check
      _
    $region15: #{tpu_custom_call.1} parent=1 // pred_check_branch
      %19 = sbr.rel (0) target = $region17
    $region16: #{tpu_custom_call.1} parent=1 // pred_region
      _
    $region17: #{tpu_custom_call.1} parent=1 // pred_fallthru
      _
    // Predicated region
    $region18: #{tpu_custom_call.1} parent=1 // pred_check
      _
    $region19: #{tpu_custom_call.1} parent=1 // pred_check_branch
      %21 = sbr.rel (0) target = $region21
    $region20: #{tpu_custom_call.1} parent=1 // pred_region
      _
    $region21: #{tpu_custom_call.1} parent=1 // pred_fallthru
      _
    // Predicated region
    $region22: #{tpu_custom_call.1} parent=1 // pred_check
      _
    $region23: #{tpu_custom_call.1} parent=1 // pred_check_branch
      %23 = sbr.rel (0) target = $region25
    $region24: #{tpu_custom_call.1} parent=1 // pred_region
      _
    $region25: #{tpu_custom_call.1} parent=1 // pred_fallthru
      _
    %v24 = vld [vmem:[%s0] sm:$0xff]
    %v25 = vld [vmem:[%s0 + $0x8] sm:$0xff]
    %v26 = vld [vmem:[%s1] sm:$0xff]
    %v27 = vld [vmem:[%s1 + $0x8] sm:$0xff]
    %v28 = vld [vmem:[%s1 + $0x10] sm:$0xff]
    %v29 = vld [vmem:[%s1 + $0x18] sm:$0xff]
    %v30 = vld [vmem:[%s1 + $0x20] sm:$0xff]
    %v31 = vld [vmem:[%s1 + $0x28] sm:$0xff]
    %v32 = vld [vmem:[%s1 + $0x30] sm:$0xff]
    %v33 = vld [vmem:[%s1 + $0x38] sm:$0xff]
    %v34 = vld [vmem:[%s1 + $0x40] sm:$0xff]
    %v35 = vld [vmem:[%s1 + $0x48] sm:$0xff]
    %v36 = vld [vmem:[%s1 + $0x50] sm:$0xff]
    %v37 = vld [vmem:[%s1 + $0x58] sm:$0xff]
    %v38 = vld [vmem:[%s1 + $0x60] sm:$0xff]
    %v39 = vld [vmem:[%s1 + $0x68] sm:$0xff]
    %v40 = vld [vmem:[%s1 + $0x70] sm:$0xff]
    %v41 = vld [vmem:[%s1 + $0x78] sm:$0xff]
    %v42 = vld [vmem:[%s1 + $0x80] sm:$0xff]
    %v43 = vld [vmem:[%s1 + $0x88] sm:$0xff]
    %v44 = vld [vmem:[%s1 + $0x90] sm:$0xff]
    %v45 = vld [vmem:[%s1 + $0x98] sm:$0xff]
    %v46 = vld [vmem:[%s1 + $0xa0] sm:$0xff]
    %v47 = vld [vmem:[%s1 + $0xa8] sm:$0xff]
    %v48 = vld [vmem:[%s1 + $0xb0] sm:$0xff]
    %v49 = vld [vmem:[%s1 + $0xb8] sm:$0xff]
    %v50 = vld [vmem:[%s2] sm:$0x3f]
    %v52 = vperm.slane %v50, 0
    %v53 = vperm.slane %v50, 1
    %v54 = vperm.slane %v50, 2
    %v55 = vperm.slane %v50, 3
    %v56 = vperm.slane %v50, 4
    %v57 = vperm.slane %v50, 5
    %vm64 = vcmask 261120
    %v66 = vsel %vm64, %v24, 0
    %v69 = vsel %vm64, %v25, 0
    %71 = vmatpush.msra.mxu0 0.0
    %72 = vmatpush.msra.mxu0 0.0
    %73 = vmatpush.msra.mxu0 0.0
    %74 = vmatpush.msra.mxu0 0.0
    %75 = vmatpush.msra.mxu0 0.0
    %76 = vmatpush.msra.mxu0 0.0
    %77 = vmatpush.msra.mxu0 0.0
    %78 = vmatpush.msra.mxu0 0.0
    %79 = vmatpush.msra.mxu0 0.0
    %80 = vmatpush.msra.mxu0 0.0
    %81 = vmatpush.msra.mxu0 0.0
    %82 = vmatpush.msra.mxu0 0.0
    %83 = vmatpush.msra.mxu0 %v44
    %84 = vmatpush.msra.mxu0 %v38
    %85 = vmatpush.msra.mxu0 %v32
    %86 = vmatpush.msra.mxu0 %v26
    %87 = vmatmul.f32.gmra.mxu0 %v66
    %v88 = vpop.f32.mrf.mxu0
    %v89 = vadd.f32 %v52, %v88
    %90 = vmatmul.f32.gmra.mxu0 %v69
    %v91 = vpop.f32.mrf.mxu0
    %v92 = vadd.f32 %v52, %v91
    %93 = vdwg.mxu0
    %94 = vmatpush.msra.mxu0 0.0
    %95 = vmatpush.msra.mxu0 0.0
    %96 = vmatpush.msra.mxu0 0.0
    %97 = vmatpush.msra.mxu0 0.0
    %98 = vmatpush.msra.mxu0 0.0
    %99 = vmatpush.msra.mxu0 0.0
    %100 = vmatpush.msra.mxu0 0.0
    %101 = vmatpush.msra.mxu0 0.0
    %102 = vmatpush.msra.mxu0 0.0
    %103 = vmatpush.msra.mxu0 0.0
    %104 = vmatpush.msra.mxu0 0.0
    %105 = vmatpush.msra.mxu0 0.0
    %106 = vmatpush.msra.mxu0 %v45
    %107 = vmatpush.msra.mxu0 %v39
    %108 = vmatpush.msra.mxu0 %v33
    %109 = vmatpush.msra.mxu0 %v27
    %110 = vmatmul.f32.gmra.mxu0 %v66
    %v111 = vpop.f32.mrf.mxu0
    %v112 = vadd.f32 %v53, %v111
    %113 = vmatmul.f32.gmra.mxu0 %v69
    %v114 = vpop.f32.mrf.mxu0
    %v115 = vadd.f32 %v53, %v114
    %116 = vdwg.mxu0
    %117 = vmatpush.msra.mxu0 0.0
    %118 = vmatpush.msra.mxu0 0.0
    %119 = vmatpush.msra.mxu0 0.0
    %120 = vmatpush.msra.mxu0 0.0
    %121 = vmatpush.msra.mxu0 0.0
    %122 = vmatpush.msra.mxu0 0.0
    %123 = vmatpush.msra.mxu0 0.0
    %124 = vmatpush.msra.mxu0 0.0
    %125 = vmatpush.msra.mxu0 0.0
    %126 = vmatpush.msra.mxu0 0.0
    %127 = vmatpush.msra.mxu0 0.0
    %128 = vmatpush.msra.mxu0 0.0
    %129 = vmatpush.msra.mxu0 %v46
    %130 = vmatpush.msra.mxu0 %v40
    %131 = vmatpush.msra.mxu0 %v34
    %132 = vmatpush.msra.mxu0 %v28
    %133 = vmatmul.f32.gmra.mxu0 %v66
    %v134 = vpop.f32.mrf.mxu0
    %v135 = vadd.f32 %v54, %v134
    %136 = vmatmul.f32.gmra.mxu0 %v69
    %v137 = vpop.f32.mrf.mxu0
    %v138 = vadd.f32 %v54, %v137
    %139 = vdwg.mxu0
    %140 = vmatpush.msra.mxu0 0.0
    %141 = vmatpush.msra.mxu0 0.0
    %142 = vmatpush.msra.mxu0 0.0
    %143 = vmatpush.msra.mxu0 0.0
    %144 = vmatpush.msra.mxu0 0.0
    %145 = vmatpush.msra.mxu0 0.0
    %146 = vmatpush.msra.mxu0 0.0
    %147 = vmatpush.msra.mxu0 0.0
    %148 = vmatpush.msra.mxu0 0.0
    %149 = vmatpush.msra.mxu0 0.0
    %150 = vmatpush.msra.mxu0 0.0
    %151 = vmatpush.msra.mxu0 0.0
    %152 = vmatpush.msra.mxu0 %v47
    %153 = vmatpush.msra.mxu0 %v41
    %154 = vmatpush.msra.mxu0 %v35
    %155 = vmatpush.msra.mxu0 %v29
    %156 = vmatmul.f32.gmra.mxu0 %v66
    %v157 = vpop.f32.mrf.mxu0
    %v158 = vadd.f32 %v55, %v157
    %159 = vmatmul.f32.gmra.mxu0 %v69
    %v160 = vpop.f32.mrf.mxu0
    %v161 = vadd.f32 %v55, %v160
    %162 = vdwg.mxu0
    %163 = vmatpush.msra.mxu0 0.0
    %164 = vmatpush.msra.mxu0 0.0
    %165 = vmatpush.msra.mxu0 0.0
    %166 = vmatpush.msra.mxu0 0.0
    %167 = vmatpush.msra.mxu0 0.0
    %168 = vmatpush.msra.mxu0 0.0
    %169 = vmatpush.msra.mxu0 0.0
    %170 = vmatpush.msra.mxu0 0.0
    %171 = vmatpush.msra.mxu0 0.0
    %172 = vmatpush.msra.mxu0 0.0
    %173 = vmatpush.msra.mxu0 0.0
    %174 = vmatpush.msra.mxu0 0.0
    %175 = vmatpush.msra.mxu0 %v48
    %176 = vmatpush.msra.mxu0 %v42
    %177 = vmatpush.msra.mxu0 %v36
    %178 = vmatpush.msra.mxu0 %v30
    %179 = vmatmul.f32.gmra.mxu0 %v66
    %v180 = vpop.f32.mrf.mxu0
    %v181 = vadd.f32 %v56, %v180
    %182 = vmatmul.f32.gmra.mxu0 %v69
    %v183 = vpop.f32.mrf.mxu0
    %v184 = vadd.f32 %v56, %v183
    %185 = vdwg.mxu0
    %186 = vmatpush.msra.mxu0 0.0
    %187 = vmatpush.msra.mxu0 0.0
    %188 = vmatpush.msra.mxu0 0.0
    %189 = vmatpush.msra.mxu0 0.0
    %190 = vmatpush.msra.mxu0 0.0
    %191 = vmatpush.msra.mxu0 0.0
    %192 = vmatpush.msra.mxu0 0.0
    %193 = vmatpush.msra.mxu0 0.0
    %194 = vmatpush.msra.mxu0 0.0
    %195 = vmatpush.msra.mxu0 0.0
    %196 = vmatpush.msra.mxu0 0.0
    %197 = vmatpush.msra.mxu0 0.0
    %198 = vmatpush.msra.mxu0 %v49
    %199 = vmatpush.msra.mxu0 %v43
    %200 = vmatpush.msra.mxu0 %v37
    %201 = vmatpush.msra.mxu0 %v31
    %202 = vmatmul.f32.gmra.mxu0 %v66
    %v203 = vpop.f32.mrf.mxu0
    %v204 = vadd.f32 %v57, %v203
    %205 = vmatmul.f32.gmra.mxu0 %v69
    %v206 = vpop.f32.mrf.mxu0
    %v207 = vadd.f32 %v57, %v206
    %208 = vdwg.mxu0
    %v209 = vlaneseq
    %v210 = vand.u32 %v209, 127
    %vm211 = vcmask 64512
    %v212 = vsel %vm211, %v89, -inf
    %213 = vmax.xlane.f32.xlu0 %v212
    %v214 = vpop.xlane.xlu0 %213
    %v215 = vsel %vm211, %v92, -inf
    %216 = vmax.xlane.f32.xlu0 %v215
    %v217 = vpop.xlane.xlu0 %216
    %vm218 = vcmp.eq.f32.partialorder %v89, %v214
    %vm219 = vcmp.eq.f32.partialorder %v92, %v217
    %v220 = vsel %vm218, %v210, 8
    %v221 = vsel %vm219, %v210, 8
    %v222 = vsel %vm211, %v220, 2147483647
    %v223 = vand.u32 %v222, 65535
    %v224 = vshra.s32 %v222, 16
    %v225 = vcvt.s32.f32 %v223
    %v226 = vcvt.s32.f32 %v224
    %227 = vmin.xlane.f32.xlu0 %v226
    %v228 = vpop.xlane.xlu0 %227
    %vm229 = vcmp.eq.f32.partialorder %v226, %v228
    %v230 = vsel %vm229, %v225, inf
    %231 = vmin.xlane.f32.xlu0 %v230
    %v232 = vpop.xlane.xlu0 %231
    %v233 = vcvt.f32.s32 %v232
    %v234 = vcvt.f32.s32 %v228
    %v235 = vshll.u32 %v234, 16
    %v236 = vadd.s32 %v235, %v233
    %v237 = vsel %vm211, %v221, 2147483647
    %v238 = vand.u32 %v237, 65535
    %v239 = vshra.s32 %v237, 16
    %v240 = vcvt.s32.f32 %v238
    %v241 = vcvt.s32.f32 %v239
    %242 = vmin.xlane.f32.xlu0 %v241
    %v243 = vpop.xlane.xlu0 %242
    %vm244 = vcmp.eq.f32.partialorder %v241, %v243
    %v245 = vsel %vm244, %v240, inf
    %246 = vmin.xlane.f32.xlu0 %v245
    %v247 = vpop.xlane.xlu0 %246
    %v248 = vcvt.f32.s32 %v247
    %v249 = vcvt.f32.s32 %v243
    %v250 = vshll.u32 %v249, 16
    %v251 = vadd.s32 %v250, %v248
    %v252 = vcvt.s32.f32 %v236
    %v253 = vcvt.s32.f32 %v251
    %vm254 = vcmp.eq.s32.totalorder %v210, %v236
    %vm255 = vcmp.eq.s32.totalorder %v210, %v251
    %v256 = vsel %vm254, -1e+30, %v89
    %v257 = vsel %vm255, -1e+30, %v92
    %v258 = vsel %vm211, %v256, -inf
    %259 = vmax.xlane.f32.xlu0 %v258
    %v260 = vpop.xlane.xlu0 %259
    %v261 = vsel %vm211, %v257, -inf
    %262 = vmax.xlane.f32.xlu0 %v261
    %v263 = vpop.xlane.xlu0 %262
    %vm264 = vcmp.eq.f32.partialorder %v256, %v260
    %vm265 = vcmp.eq.f32.partialorder %v257, %v263
    %v266 = vsel %vm264, %v210, 8
    %v267 = vsel %vm265, %v210, 8
    %v268 = vsel %vm211, %v266, 2147483647
    %v269 = vand.u32 %v268, 65535
    %v270 = vshra.s32 %v268, 16
    %v271 = vcvt.s32.f32 %v269
    %v272 = vcvt.s32.f32 %v270
    %273 = vmin.xlane.f32.xlu0 %v272
    %v274 = vpop.xlane.xlu0 %273
    %vm275 = vcmp.eq.f32.partialorder %v272, %v274
    %v276 = vsel %vm275, %v271, inf
    %277 = vmin.xlane.f32.xlu0 %v276
    %v278 = vpop.xlane.xlu0 %277
    %v279 = vcvt.f32.s32 %v278
    %v280 = vcvt.f32.s32 %v274
    %v281 = vshll.u32 %v280, 16
    %v282 = vadd.s32 %v281, %v279
    %v283 = vsel %vm211, %v267, 2147483647
    %v284 = vand.u32 %v283, 65535
    %v285 = vshra.s32 %v283, 16
    %v286 = vcvt.s32.f32 %v284
    %v287 = vcvt.s32.f32 %v285
    %288 = vmin.xlane.f32.xlu0 %v287
    %v289 = vpop.xlane.xlu0 %288
    %vm290 = vcmp.eq.f32.partialorder %v287, %v289
    %v291 = vsel %vm290, %v286, inf
    %292 = vmin.xlane.f32.xlu0 %v291
    %v293 = vpop.xlane.xlu0 %292
    %v294 = vcvt.f32.s32 %v293
    %v295 = vcvt.f32.s32 %v289
    %v296 = vshll.u32 %v295, 16
    %v297 = vadd.s32 %v296, %v294
    %v298 = vcvt.s32.f32 %v282
    %v299 = vcvt.s32.f32 %v297
    %vm300 = vcmask 7168
    %v301 = vsel %vm300, %v214, %v260
    %v302 = vsel %vm300, %v217, %v263
    %vm303 = vcmask 15360
    %v304 = vsel %vm303, %v301, -inf
    %305 = vmax.xlane.f32.xlu0 %v304
    %v306 = vpop.xlane.xlu0 %305
    %v307 = vsel %vm303, %v302, -inf
    %308 = vmax.xlane.f32.xlu0 %v307
    %v309 = vpop.xlane.xlu0 %308
    %v310 = vsub.f32 %v301, %v306
    %v311 = vsub.f32 %v302, %v309
    %v312 = vmul.f32 %v310, 1.442695
    %v313 = vpow.pop %v312
    %v314 = vmul.f32 %v311, 1.442695
    %v315 = vpow.pop %v314
    %v316 = vsel %vm303, %v313, 0.0
    %317 = vadd.xlane.f32.xlu0 %v316
    %v318 = vpop.xlane.xlu0 %317
    %v319 = vsel %vm303, %v315, 0.0
    %320 = vadd.xlane.f32.xlu0 %v319
    %v321 = vpop.xlane.xlu0 %320
    %v322 = vrcp.pop %v318
    %v323 = vmul.f32 %v318, %v322
    %v324 = vsub.f32 1.0, %v323
    %v325 = vmul.f32 %v322, %v324
    %v326 = vadd.f32 %v322, %v325
    %vm327 = vweird.f32 %v318
    %vm328 = vweird.f32 %v322
    %vm329 = vmor %vm327, %vm328
    %v330 = vsel %vm329, %v322, %v326
    %v331 = vand.u32 2147483647, %v318
    %vm332 = vcmp.eq.f32.partialorder %v331, 8.507059e+37
    %v333 = vand.u32 %v318, 2147483648
    %v334 = vor.u32 1.1754944e-38, %v333
    %v335 = vsel %vm332, %v334, %v330
    %v336 = vmul.f32 %v313, %v335
    %v337 = vrcp.pop %v321
    %v338 = vmul.f32 %v321, %v337
    %v339 = vsub.f32 1.0, %v338
    %v340 = vmul.f32 %v337, %v339
    %v341 = vadd.f32 %v337, %v340
    %vm342 = vweird.f32 %v321
    %vm343 = vweird.f32 %v337
    %vm344 = vmor %vm342, %vm343
    %v345 = vsel %vm344, %v337, %v341
    %v346 = vand.u32 2147483647, %v321
    %vm347 = vcmp.eq.f32.partialorder %v346, 8.507059e+37
    %v348 = vand.u32 %v321, 2147483648
    %v349 = vor.u32 1.1754944e-38, %v348
    %v350 = vsel %vm347, %v349, %v345
    %v351 = vmul.f32 %v315, %v350
    %v352 = vmax.f32 %v112, 0.0
    %v353 = vmax.f32 %v135, 0.0
    %v354 = vmax.f32 %v158, 0.0
    %v355 = vmax.f32 %v181, 0.0
    %v356 = vmax.f32 %v204, 0.0
    %v357 = vmax.f32 %v115, 0.0
    %v358 = vmax.f32 %v138, 0.0
    %v359 = vmax.f32 %v161, 0.0
    %v360 = vmax.f32 %v184, 0.0
    %v361 = vmax.f32 %v207, 0.0
    %v362 = vld [vmem:[%s5] sm:$0x1f]
    %v363 = vld [vmem:[%s4] sm:$0x1f]
    %v365 = vperm.slane %v363, 0
    %v366 = vperm.slane %v363, 1
    %v367 = vperm.slane %v363, 2
    %v368 = vperm.slane %v363, 3
    %v369 = vperm.slane %v363, 4
    %vm375 = vcmp.eq.f32.partialorder %v365, %v252
    %vm376 = vcmp.eq.f32.partialorder %v366, %v252
    %vm377 = vcmp.eq.f32.partialorder %v367, %v252
    %vm378 = vcmp.eq.f32.partialorder %v368, %v252
    %vm379 = vcmp.eq.f32.partialorder %v369, %v252
    %vm380 = vcmp.eq.f32.partialorder %v365, %v253
    %vm381 = vcmp.eq.f32.partialorder %v366, %v253
    %vm382 = vcmp.eq.f32.partialorder %v367, %v253
    %vm383 = vcmp.eq.f32.partialorder %v368, %v253
    %vm384 = vcmp.eq.f32.partialorder %v369, %v253
    %386 = vset.pattern.permute.xlu0 0
    %387 = vperm.xlu0 %386, %v336
    %v388 = vpop.permute.xlu0 %387
    %391 = vset.pattern.permute.xlu0 0
    %392 = vperm.xlu0 %391, %v351
    %v393 = vpop.permute.xlu0 %392
    %v395 = vsel %vm375, %v388, 0.0
    %v396 = vsel %vm376, %v388, 0.0
    %v397 = vsel %vm377, %v388, 0.0
    %v398 = vsel %vm378, %v388, 0.0
    %v399 = vsel %vm379, %v388, 0.0
    %v400 = vsel %vm380, %v393, 0.0
    %v401 = vsel %vm381, %v393, 0.0
    %v402 = vsel %vm382, %v393, 0.0
    %v403 = vsel %vm383, %v393, 0.0
    %v404 = vsel %vm384, %v393, 0.0
    %v406 = vperm.slane %v362, 0
    %v407 = vperm.slane %v362, 1
    %v408 = vperm.slane %v362, 2
    %v409 = vperm.slane %v362, 3
    %v410 = vperm.slane %v362, 4
    %v416 = vadd.f32 %v406, %v395
    %v417 = vadd.f32 %v407, %v396
    %v418 = vadd.f32 %v408, %v397
    %v419 = vadd.f32 %v409, %v398
    %v420 = vadd.f32 %v410, %v399
    %v421 = vadd.f32 %v406, %v400
    %v422 = vadd.f32 %v407, %v401
    %v423 = vadd.f32 %v408, %v402
    %v424 = vadd.f32 %v409, %v403
    %v425 = vadd.f32 %v410, %v404
    %vm426 = vcmp.eq.f32.partialorder %v365, %v298
    %vm427 = vcmp.eq.f32.partialorder %v366, %v298
    %vm428 = vcmp.eq.f32.partialorder %v367, %v298
    %vm429 = vcmp.eq.f32.partialorder %v368, %v298
    %vm430 = vcmp.eq.f32.partialorder %v369, %v298
    %vm431 = vcmp.eq.f32.partialorder %v365, %v299
    %vm432 = vcmp.eq.f32.partialorder %v366, %v299
    %vm433 = vcmp.eq.f32.partialorder %v367, %v299
    %vm434 = vcmp.eq.f32.partialorder %v368, %v299
    %vm435 = vcmp.eq.f32.partialorder %v369, %v299
    %436 = vset.pattern.permute.xlu0 1
    %437 = vperm.xlu0 %436, %v336
    %v438 = vpop.permute.xlu0 %437
    %440 = vset.pattern.permute.xlu0 1
    %441 = vperm.xlu0 %440, %v351
    %v442 = vpop.permute.xlu0 %441
    %v444 = vsel %vm426, %v438, 0.0
    %v445 = vsel %vm427, %v438, 0.0
    %v446 = vsel %vm428, %v438, 0.0
    %v447 = vsel %vm429, %v438, 0.0
    %v448 = vsel %vm430, %v438, 0.0
    %v449 = vsel %vm431, %v442, 0.0
    %v450 = vsel %vm432, %v442, 0.0
    %v451 = vsel %vm433, %v442, 0.0
    %v452 = vsel %vm434, %v442, 0.0
    %v453 = vsel %vm435, %v442, 0.0
    %v454 = vadd.f32 %v416, %v444
    %v455 = vadd.f32 %v417, %v445
    %v456 = vadd.f32 %v418, %v446
    %v457 = vadd.f32 %v419, %v447
    %v458 = vadd.f32 %v420, %v448
    %v459 = vadd.f32 %v421, %v449
    %v460 = vadd.f32 %v422, %v450
    %v461 = vadd.f32 %v423, %v451
    %v462 = vadd.f32 %v424, %v452
    %v463 = vadd.f32 %v425, %v453
    %v464 = vmul.f32 %v352, %v454
    %v465 = vmul.f32 %v353, %v455
    %v466 = vmul.f32 %v354, %v456
    %v467 = vmul.f32 %v355, %v457
    %v468 = vmul.f32 %v356, %v458
    %v469 = vmul.f32 %v357, %v459
    %v470 = vmul.f32 %v358, %v460
    %v471 = vmul.f32 %v359, %v461
    %v472 = vmul.f32 %v360, %v462
    %v473 = vmul.f32 %v361, %v463
    %v474 = vld [vmem:[%s3] sm:$0xff]
    %v475 = vld [vmem:[%s3 + $0x8] sm:$0xff]
    %v476 = vld [vmem:[%s3 + $0x10] sm:$0xff]
    %v477 = vld [vmem:[%s3 + $0x18] sm:$0xff]
    %v478 = vld [vmem:[%s3 + $0x20] sm:$0xff]
    %v479 = vld [vmem:[%s3 + $0x28] sm:$0xff]
    %v480 = vld [vmem:[%s3 + $0x30] sm:$0xff]
    %v481 = vld [vmem:[%s3 + $0x38] sm:$0xff]
    %v482 = vld [vmem:[%s3 + $0x40] sm:$0xff]
    %v483 = vld [vmem:[%s3 + $0x48] sm:$0xff]
    %v484 = vld [vmem:[%s3 + $0x50] sm:$0xff]
    %v485 = vld [vmem:[%s3 + $0x58] sm:$0xff]
    %v486 = vld [vmem:[%s3 + $0x60] sm:$0xff]
    %v487 = vld [vmem:[%s3 + $0x68] sm:$0xff]
    %v488 = vld [vmem:[%s3 + $0x70] sm:$0xff]
    %v489 = vld [vmem:[%s3 + $0x78] sm:$0xff]
    %v490 = vld [vmem:[%s3 + $0x80] sm:$0xff]
    %v491 = vld [vmem:[%s3 + $0x88] sm:$0xff]
    %v492 = vld [vmem:[%s3 + $0x90] sm:$0xff]
    %v493 = vld [vmem:[%s3 + $0x98] sm:$0xff]
    %v494 = vld [vmem:[%s3 + $0xa0] sm:$0xff]
    %v495 = vld [vmem:[%s3 + $0xa8] sm:$0xff]
    %v496 = vld [vmem:[%s3 + $0xb0] sm:$0xff]
    %v497 = vld [vmem:[%s3 + $0xb8] sm:$0xff]
    %v498 = vld [vmem:[%s3 + $0xc0] sm:$0xff]
    %v499 = vld [vmem:[%s3 + $0xc8] sm:$0xff]
    %v500 = vld [vmem:[%s3 + $0xd0] sm:$0xff]
    %v501 = vld [vmem:[%s3 + $0xd8] sm:$0xff]
    %v502 = vld [vmem:[%s3 + $0xe0] sm:$0xff]
    %v503 = vld [vmem:[%s3 + $0xe8] sm:$0xff]
    %v504 = vld [vmem:[%s3 + $0xf0] sm:$0xff]
    %v505 = vld [vmem:[%s3 + $0xf8] sm:$0xff]
    %v506 = vld [vmem:[%s3 + $0x100] sm:$0xff]
    %v507 = vld [vmem:[%s3 + $0x108] sm:$0xff]
    %v508 = vld [vmem:[%s3 + $0x110] sm:$0xff]
    %v509 = vld [vmem:[%s3 + $0x118] sm:$0xff]
    %v510 = vld [vmem:[%s3 + $0x120] sm:$0xff]
    %v511 = vld [vmem:[%s3 + $0x128] sm:$0xff]
    %v512 = vld [vmem:[%s3 + $0x130] sm:$0xff]
    %v513 = vld [vmem:[%s3 + $0x138] sm:$0xff]
    %v514 = vld [vmem:[%s3 + $0x140] sm:$0xff]
    %v515 = vld [vmem:[%s3 + $0x148] sm:$0xff]
    %v516 = vld [vmem:[%s3 + $0x150] sm:$0xff]
    %v517 = vld [vmem:[%s3 + $0x158] sm:$0xff]
    %v518 = vld [vmem:[%s3 + $0x160] sm:$0xff]
    %v519 = vld [vmem:[%s3 + $0x168] sm:$0xff]
    %v520 = vld [vmem:[%s3 + $0x170] sm:$0xff]
    %v521 = vld [vmem:[%s3 + $0x178] sm:$0xff]
    %v522 = vld [vmem:[%s3 + $0x180] sm:$0xff]
    %v523 = vld [vmem:[%s3 + $0x188] sm:$0xff]
    %v524 = vld [vmem:[%s3 + $0x190] sm:$0xff]
    %v525 = vld [vmem:[%s3 + $0x198] sm:$0xff]
    %v526 = vld [vmem:[%s3 + $0x1a0] sm:$0xff]
    %v527 = vld [vmem:[%s3 + $0x1a8] sm:$0xff]
    %v528 = vld [vmem:[%s3 + $0x1b0] sm:$0xff]
    %v529 = vld [vmem:[%s3 + $0x1b8] sm:$0xff]
    %v530 = vld [vmem:[%s3 + $0x1c0] sm:$0xff]
    %v531 = vld [vmem:[%s3 + $0x1c8] sm:$0xff]
    %v532 = vld [vmem:[%s3 + $0x1d0] sm:$0xff]
    %v533 = vld [vmem:[%s3 + $0x1d8] sm:$0xff]
    %v534 = vld [vmem:[%s3 + $0x1e0] sm:$0xff]
    %v535 = vld [vmem:[%s3 + $0x1e8] sm:$0xff]
    %v536 = vld [vmem:[%s3 + $0x1f0] sm:$0xff]
    %v537 = vld [vmem:[%s3 + $0x1f8] sm:$0xff]
    %v538 = vld [vmem:[%s3 + $0x200] sm:$0xff]
    %v539 = vld [vmem:[%s3 + $0x208] sm:$0xff]
    %v540 = vld [vmem:[%s3 + $0x210] sm:$0xff]
    %v541 = vld [vmem:[%s3 + $0x218] sm:$0xff]
    %v542 = vld [vmem:[%s3 + $0x220] sm:$0xff]
    %v543 = vld [vmem:[%s3 + $0x228] sm:$0xff]
    %v544 = vld [vmem:[%s3 + $0x230] sm:$0xff]
    %v545 = vld [vmem:[%s3 + $0x238] sm:$0xff]
    %v546 = vld [vmem:[%s3 + $0x240] sm:$0xff]
    %v547 = vld [vmem:[%s3 + $0x248] sm:$0xff]
    %v548 = vld [vmem:[%s3 + $0x250] sm:$0xff]
    %v549 = vld [vmem:[%s3 + $0x258] sm:$0xff]
    %v550 = vld [vmem:[%s3 + $0x260] sm:$0xff]
    %v551 = vld [vmem:[%s3 + $0x268] sm:$0xff]
    %v552 = vld [vmem:[%s3 + $0x270] sm:$0xff]
    %v553 = vld [vmem:[%s3 + $0x278] sm:$0xff]
    %554 = vmatpush.msra.mxu0 %v489
    %555 = vmatpush.msra.mxu0 %v488
    %556 = vmatpush.msra.mxu0 %v487
    %557 = vmatpush.msra.mxu0 %v486
    %558 = vmatpush.msra.mxu0 %v485
    %559 = vmatpush.msra.mxu0 %v484
    %560 = vmatpush.msra.mxu0 %v483
    %561 = vmatpush.msra.mxu0 %v482
    %562 = vmatpush.msra.mxu0 %v481
    %563 = vmatpush.msra.mxu0 %v480
    %564 = vmatpush.msra.mxu0 %v479
    %565 = vmatpush.msra.mxu0 %v478
    %566 = vmatpush.msra.mxu0 %v477
    %567 = vmatpush.msra.mxu0 %v476
    %568 = vmatpush.msra.mxu0 %v475
    %569 = vmatpush.msra.mxu0 %v474
    %570 = vmatmul.f32.gmra.mxu0 %v464
    %v571 = vpop.f32.mrf.mxu0
    %v572 = vadd.f32 0.0, %v571
    %573 = vmatmul.f32.gmra.mxu0 %v469
    %v574 = vpop.f32.mrf.mxu0
    %v575 = vadd.f32 0.0, %v574
    %576 = vdwg.mxu0
    %577 = vmatpush.msra.mxu0 %v505
    %578 = vmatpush.msra.mxu0 %v504
    %579 = vmatpush.msra.mxu0 %v503
    %580 = vmatpush.msra.mxu0 %v502
    %581 = vmatpush.msra.mxu0 %v501
    %582 = vmatpush.msra.mxu0 %v500
    %583 = vmatpush.msra.mxu0 %v499
    %584 = vmatpush.msra.mxu0 %v498
    %585 = vmatpush.msra.mxu0 %v497
    %586 = vmatpush.msra.mxu0 %v496
    %587 = vmatpush.msra.mxu0 %v495
    %588 = vmatpush.msra.mxu0 %v494
    %589 = vmatpush.msra.mxu0 %v493
    %590 = vmatpush.msra.mxu0 %v492
    %591 = vmatpush.msra.mxu0 %v491
    %592 = vmatpush.msra.mxu0 %v490
    %593 = vmatmul.f32.gmra.mxu0 %v465
    %v594 = vpop.f32.mrf.mxu0
    %v595 = vadd.f32 %v572, %v594
    %596 = vmatmul.f32.gmra.mxu0 %v470
    %v597 = vpop.f32.mrf.mxu0
    %v598 = vadd.f32 %v575, %v597
    %599 = vdwg.mxu0
    %600 = vmatpush.msra.mxu0 %v521
    %601 = vmatpush.msra.mxu0 %v520
    %602 = vmatpush.msra.mxu0 %v519
    %603 = vmatpush.msra.mxu0 %v518
    %604 = vmatpush.msra.mxu0 %v517
    %605 = vmatpush.msra.mxu0 %v516
    %606 = vmatpush.msra.mxu0 %v515
    %607 = vmatpush.msra.mxu0 %v514
    %608 = vmatpush.msra.mxu0 %v513
    %609 = vmatpush.msra.mxu0 %v512
    %610 = vmatpush.msra.mxu0 %v511
    %611 = vmatpush.msra.mxu0 %v510
    %612 = vmatpush.msra.mxu0 %v509
    %613 = vmatpush.msra.mxu0 %v508
    %614 = vmatpush.msra.mxu0 %v507
    %615 = vmatpush.msra.mxu0 %v506
    %616 = vmatmul.f32.gmra.mxu0 %v466
    %v617 = vpop.f32.mrf.mxu0
    %v618 = vadd.f32 %v595, %v617
    %619 = vmatmul.f32.gmra.mxu0 %v471
    %v620 = vpop.f32.mrf.mxu0
    %v621 = vadd.f32 %v598, %v620
    %622 = vdwg.mxu0
    %623 = vmatpush.msra.mxu0 %v537
    %624 = vmatpush.msra.mxu0 %v536
    %625 = vmatpush.msra.mxu0 %v535
    %626 = vmatpush.msra.mxu0 %v534
    %627 = vmatpush.msra.mxu0 %v533
    %628 = vmatpush.msra.mxu0 %v532
    %629 = vmatpush.msra.mxu0 %v531
    %630 = vmatpush.msra.mxu0 %v530
    %631 = vmatpush.msra.mxu0 %v529
    %632 = vmatpush.msra.mxu0 %v528
    %633 = vmatpush.msra.mxu0 %v527
    %634 = vmatpush.msra.mxu0 %v526
    %635 = vmatpush.msra.mxu0 %v525
    %636 = vmatpush.msra.mxu0 %v524
    %637 = vmatpush.msra.mxu0 %v523
    %638 = vmatpush.msra.mxu0 %v522
    %639 = vmatmul.f32.gmra.mxu0 %v467
    %v640 = vpop.f32.mrf.mxu0
    %v641 = vadd.f32 %v618, %v640
    %642 = vmatmul.f32.gmra.mxu0 %v472
    %v643 = vpop.f32.mrf.mxu0
    %v644 = vadd.f32 %v621, %v643
    %645 = vdwg.mxu0
    %646 = vmatpush.msra.mxu0 %v553
    %647 = vmatpush.msra.mxu0 %v552
    %648 = vmatpush.msra.mxu0 %v551
    %649 = vmatpush.msra.mxu0 %v550
    %650 = vmatpush.msra.mxu0 %v549
    %651 = vmatpush.msra.mxu0 %v548
    %652 = vmatpush.msra.mxu0 %v547
    %653 = vmatpush.msra.mxu0 %v546
    %654 = vmatpush.msra.mxu0 %v545
    %655 = vmatpush.msra.mxu0 %v544
    %656 = vmatpush.msra.mxu0 %v543
    %657 = vmatpush.msra.mxu0 %v542
    %658 = vmatpush.msra.mxu0 %v541
    %659 = vmatpush.msra.mxu0 %v540
    %660 = vmatpush.msra.mxu0 %v539
    %661 = vmatpush.msra.mxu0 %v538
    %662 = vmatmul.f32.gmra.mxu0 %v468
    %v663 = vpop.f32.mrf.mxu0
    %v664 = vadd.f32 %v641, %v663
    %665 = vmatmul.f32.gmra.mxu0 %v473
    %v666 = vpop.f32.mrf.mxu0
    %v667 = vadd.f32 %v644, %v666
    %668 = vdwg.mxu0
    %669 = vst.msk [vmem:[#allocation2] sm:$0xff] %vm64, %v664
    %670 = vst.msk [vmem:[#allocation2 + $0x8] sm:$0xff] %vm64, %v667
    // Predicated region
    $region26: #{tpu_custom_call.1} parent=1 // pred_check
      _
    $region27: #{tpu_custom_call.1} parent=1 // pred_check_branch
      %672 = sbr.rel (0) target = $region29
    $region28: #{tpu_custom_call.1} parent=1 // pred_region
      %674 = vsyncadd [#allocation3], 0
      %s675 = sshll.u32 [#allocation2], 4
      %s676 = int_to_ptr.vmem [resolvable:$true] %s675
      %s677 = sshll.u32 %s6, 4
      %s678 = int_to_ptr.hbm [resolvable:$true] %s677
      %683 = dma.vmem_to_hbm [thread:$0]  %s676, 256, %s678, [#allocation3], 128, 128, 8
    $region29: #{tpu_custom_call.1} parent=1 // pred_fallthru
      _
    // Predicated region
    $region30: #{tpu_custom_call.1} parent=1 // pred_check
      _
    $region31: #{tpu_custom_call.1} parent=1 // pred_check_branch
      %685 = sbr.rel (0) target = $region33
    $region32: #{tpu_custom_call.1} parent=1 // pred_region
      %687 = dma.done [#allocation3], 256
    $region33: #{tpu_custom_call.1} parent=1 // pred_fallthru
      _
    %688 = vsyncpa [#allocation3], 1

</llo_original>
